<compile_context>
chip_gen: v7x
topology: tpu7x:2x2x1
jax: 0.10.0
libtpu: 0.0.40
codegen_flags: <defaults>
</compile_context>

<pallas_src>
import jax
import jax.numpy as jnp
import numpy as np
from jax import lax
from jax.experimental import pallas as pl
from jax.experimental.pallas import tpu as pltpu


# ---------------------------------------------------------------------------
# Pass 1: fused projection  z = h @ W_cat   (W_cat = heads concatenated)
# ---------------------------------------------------------------------------
def _project_kernel(h_ref, w_ref, z_ref):
    z_ref[...] = jnp.dot(h_ref[...], w_ref[...],
                         preferred_element_type=jnp.float32)


def _project(h, w_cat, tile_m):
    N, in_dim = h.shape
    hd = w_cat.shape[1]
    return pl.pallas_call(
        _project_kernel,
        out_shape=jax.ShapeDtypeStruct((N, hd), jnp.float32),
        grid_spec=pltpu.PrefetchScalarGridSpec(
            num_scalar_prefetch=0,
            grid=(N // tile_m,),
            in_specs=[
                pl.BlockSpec((tile_m, in_dim), lambda i: (i, 0)),
                pl.BlockSpec((in_dim, hd), lambda i: (0, 0)),
            ],
            out_specs=pl.BlockSpec((tile_m, hd), lambda i: (i, 0)),
        ),
        compiler_params=pltpu.CompilerParams(
            dimension_semantics=("parallel",)),
    )(h, w_cat)


# ---------------------------------------------------------------------------
# Pass 2: tiled attention with online (streaming) softmax over source tiles
# ---------------------------------------------------------------------------
def _make_attn_kernel(add_residual, tile_v, tile_u, v_sub, u_chunk):
    n_vsub = tile_v // v_sub
    n_uchunk = tile_u // u_chunk

    def kernel(counts_ref, z_v_ref, z_u_ref, adjT_ref, snorm_ref, scale_ref,
               shift_ref, *rest):
        if add_residual:
            h_in_ref, out_ref, mask_sc, m_sc, l_sc, acc_sc = rest
        else:
            out_ref, mask_sc, m_sc, l_sc, acc_sc = rest
            h_in_ref = None

        vi = pl.program_id(1)
        ui = pl.program_id(2)

        @pl.when(ui == 0)
        def _init():
            m_sc[...] = jnp.full(m_sc.shape, -jnp.inf, dtype=m_sc.dtype)
            l_sc[...] = jnp.zeros(l_sc.shape, dtype=l_sc.dtype)
            acc_sc[...] = jnp.zeros(acc_sc.shape, dtype=acc_sc.dtype)

        # Skip adjacency tiles with no edges (count scalar-prefetched).
        @pl.when(counts_ref[vi, ui] > 0)
        def _update():
            # Stage the int8 adjacency tile (transposed: [TU, TV]) as f32 so
            # the inner loop only does cheap f32 sublane slices.
            mask_sc[...] = adjT_ref[...].astype(jnp.float32)

            # Static loop over V_SUB-row destination sub-tiles; the inner
            # fori_loop walks the source tile in U_CHUNK-row chunks so every
            # temporary is only a few vregs (register resident, no spills).
            for sv in range(n_vsub):
                v0 = sv * v_sub
                z_v = z_v_ref[pl.ds(v0, v_sub), :]          # [VS, D]
                carry0 = (m_sc[pl.ds(v0, v_sub), :],
                          l_sc[pl.ds(v0, v_sub), :],
                          acc_sc[pl.ds(v0, v_sub), :])

                def body(c, carry, _v0=v0, _z_v=z_v):
                    m, l, acc = carry
                    off = pl.multiple_of(c * u_chunk, u_chunk)
                    z_u = z_u_ref[pl.ds(off, u_chunk), :]            # [UC, D]
                    msk = mask_sc[pl.ds(off, u_chunk), pl.ds(_v0, v_sub)]
                    # e[u, v, d] = z_u[u, d] * z_v[v, d]
                    e = z_u[:, None, :] * _z_v[None, :, :]       # [UC, VS, D]
                    # Online (unmasked upper-bound) max keeps exp() <= 1.
                    m_new = jnp.maximum(m, jnp.max(e, axis=0))       # [VS, D]
                    r = jnp.exp(m - m_new)
                    # Multiplicative masking: non-edges contribute exactly 0.
                    p = jnp.exp(e - m_new[None, :, :]) * msk[:, :, None]
                    l = r * l + jnp.sum(p, axis=0)
                    acc = r * acc + jnp.sum(p * z_u[:, None, :], axis=0)
                    return m_new, l, acc

                m1, l1, a1 = lax.fori_loop(0, n_uchunk, body, carry0)
                m_sc[pl.ds(v0, v_sub), :] = m1
                l_sc[pl.ds(v0, v_sub), :] = l1
                acc_sc[pl.ds(v0, v_sub), :] = a1

        @pl.when(ui == pl.num_programs(2) - 1)
        def _finalize():
            # Assumes every destination node has >= 1 incoming edge (the test
            # adds self-loops); otherwise 0/0, same as the PyTorch reference.
            h_out = acc_sc[...] / l_sc[...]                          # [TV, D]
            # graph_norm + eval-mode BatchNorm folded into one scale + shift.
            h_out = h_out * (snorm_ref[...] * scale_ref[0]) + shift_ref[0]
            # ELU(alpha=1)
            h_out = jnp.where(h_out > 0.0, h_out, jnp.exp(h_out) - 1.0)
            # TODO(synk): F.dropout on alpha / output is identity in eval mode.
            if add_residual:
                h_out = h_out + h_in_ref[...]
            out_ref[...] = h_out.astype(out_ref.dtype)

    return kernel


def gat_layer_forward(h, adj, snorm_n, W, bn_scale, bn_shift, residual,
                      *, tile_v=128, tile_u=128, v_sub=8, u_chunk=8):
    """h:[N,in_dim], adj:[N_dst,N_src] (adj[v,u]=1 iff edge u->v),
       snorm_n:[N,1], W:[H,in_dim,out_dim], bn_scale/shift:[H,1,out_dim].
       Returns the concatenated heads [N, H*out_dim] (+ residual)."""
    num_heads, in_dim, out_dim = W.shape
    N = h.shape[0]
    residual = bool(residual) and (in_dim == num_heads * out_dim)

    tile_v = min(tile_v, N)
    tile_u = min(tile_u, N)
    assert N % tile_v == 0 and N % tile_u == 0, "N must divide tile sizes"
    assert tile_v % v_sub == 0 and tile_u % u_chunk == 0
    assert out_dim % 128 == 0, "feature dim must be lane dense"

    # ---- Pass 1: one fused matmul; z lands in the concatenated layout.
    w_cat = jnp.transpose(W, (1, 0, 2)).reshape(in_dim, num_heads * out_dim)
    tile_m = min(256, N)
    while N % tile_m:
        tile_m //= 2
    z = _project(h, w_cat, tile_m)

    # ---- Pass 2 setup
    nv, nu = N // tile_v, N // tile_u
    # per-tile edge counts (scalar prefetch) -> skip empty adjacency tiles
    counts = adj.reshape(nv, tile_v, nu, tile_u).sum(axis=(1, 3))
    counts = counts.astype(jnp.int32)
    # adjacency transposed to [N_src, N_dst], streamed as int8 (4x less HBM)
    adj_t = adj.T.astype(jnp.int8)

    grid = (num_heads, nv, nu)
    in_specs = [
        pl.BlockSpec((tile_v, out_dim), lambda hd, vi, ui, cnt: (vi, hd)),  # z_v
        pl.BlockSpec((tile_u, out_dim), lambda hd, vi, ui, cnt: (ui, hd)),  # z_u
        pl.BlockSpec((tile_u, tile_v), lambda hd, vi, ui, cnt: (ui, vi)),   # adj^T
        pl.BlockSpec((tile_v, 1), lambda hd, vi, ui, cnt: (vi, 0)),         # snorm
        pl.BlockSpec((1, 1, out_dim), lambda hd, vi, ui, cnt: (hd, 0, 0)),  # bn scale
        pl.BlockSpec((1, 1, out_dim), lambda hd, vi, ui, cnt: (hd, 0, 0)),  # bn shift
    ]
    inputs = [z, z, adj_t, snorm_n, bn_scale, bn_shift]
    if residual:
        # residual slice of h matching this head's output columns
        in_specs.append(
            pl.BlockSpec((tile_v, out_dim), lambda hd, vi, ui, cnt: (vi, hd)))
        inputs.append(h)

    cost = pl.CostEstimate(
        flops=int(6 * num_heads * N * N * out_dim
                  + 2 * N * in_dim * num_heads * out_dim),
        transcendentals=int(num_heads * N * N * out_dim),
        bytes_accessed=int(num_heads * N * N                       # adj^T (i8)
                           + 2 * num_heads * N * out_dim * 4       # z reads
                           + 2 * N * num_heads * out_dim * 4),     # out + res
    )

    kernel = _make_attn_kernel(residual, tile_v, tile_u, v_sub, u_chunk)

    out = pl.pallas_call(
        kernel,
        out_shape=jax.ShapeDtypeStruct((N, num_heads * out_dim), jnp.float32),
        grid_spec=pltpu.PrefetchScalarGridSpec(
            num_scalar_prefetch=1,
            grid=grid,
            in_specs=in_specs,
            # lane-dense, already-concatenated output layout
            out_specs=pl.BlockSpec((tile_v, out_dim),
                                   lambda hd, vi, ui, cnt: (vi, hd)),
            scratch_shapes=[
                pltpu.VMEM((tile_u, tile_v), jnp.float32),   # staged f32 mask
                pltpu.VMEM((tile_v, out_dim), jnp.float32),  # running max m
                pltpu.VMEM((tile_v, out_dim), jnp.float32),  # denominator l
                pltpu.VMEM((tile_v, out_dim), jnp.float32),  # accumulator
            ],
        ),
        compiler_params=pltpu.CompilerParams(
            dimension_semantics=("parallel", "parallel", "arbitrary")),
        cost_estimate=cost,
    )(counts, *inputs)
    return out


# ---------------------------------------------------------------------------
# Pure-JAX reference mirroring the PyTorch/DGL forward
# ---------------------------------------------------------------------------
def gat_layer_ref(h, adj, snorm_n, W, bn_scale, bn_shift, residual):
    outs = []
    for k in range(W.shape[0]):
        z = h @ W[k]
        mask = adj[:, :, None] > 0.0
        e = jnp.where(mask, z[:, None, :] * z[None, :, :], -1e30)
        e_max = jnp.max(e, axis=1, keepdims=True)
        p = jnp.where(mask, jnp.exp(e - e_max), 0.0)
        alpha = p / jnp.sum(p, axis=1, keepdims=True)
        ho = jnp.sum(alpha * z[None, :, :], axis=1)
        ho = ho * snorm_n
        ho = ho * bn_scale[k, 0] + bn_shift[k, 0]
        ho = jnp.where(ho > 0.0, ho, jnp.exp(ho) - 1.0)
        outs.append(ho)
    h_cat = jnp.concatenate(outs, axis=1)
    if residual:
        h_cat = h + h_cat
    return h_cat


if __name__ == "__main__":
    # residual active since in_dim == out_dim * num_heads.
    N, out_dim, num_heads = 256, 128, 2
    in_dim = out_dim * num_heads          # 256
    residual = True

    key = jax.random.PRNGKey(0)
    k_h, k_w, k_adj, k_sn, k_g, k_b, k_m, k_v = jax.random.split(key, 8)

    # h / W quantized to bf16-representable f32 values so the MXU projection
    # is exact regardless of matmul precision mode (keeps the check tight).
    h = (jax.random.normal(k_h, (N, in_dim), dtype=jnp.float32) * 0.1
         ).astype(jnp.bfloat16).astype(jnp.float32)

    # per-head fc weights (nn.Linear(in_dim, out_dim, bias=False)), stored
    # already transposed for z = h @ W[k]
    W = (jax.random.normal(k_w, (num_heads, in_dim, out_dim),
                           dtype=jnp.float32) * 0.1
         ).astype(jnp.bfloat16).astype(jnp.float32)

    # dense adjacency mask (replaces the DGL graph object): sparse random
    # edges plus self-loops so every node has at least one incoming message.
    adj = (jax.random.uniform(k_adj, (N, N)) < 0.1).astype(jnp.float32)
    adj = jnp.maximum(adj, jnp.eye(N, dtype=jnp.float32))

    # graph-norm factors (snorm_n), shape [N, 1]
    snorm_n = jax.random.uniform(k_sn, (N, 1), minval=0.2, maxval=1.0,
                                 dtype=jnp.float32)

    # BatchNorm1d(out_dim) eval-mode parameters, deterministic & non-trivial
    gamma = jax.random.uniform(k_g, (num_heads, 1, out_dim), minval=0.5,
                               maxval=1.5, dtype=jnp.float32)
    beta = jax.random.normal(k_b, (num_heads, 1, out_dim),
                             dtype=jnp.float32) * 0.1
    run_mean = jax.random.normal(k_m, (num_heads, 1, out_dim),
                                 dtype=jnp.float32) * 0.1
    run_var = jax.random.uniform(k_v, (num_heads, 1, out_dim), minval=0.5,
                                 maxval=1.5, dtype=jnp.float32)
    eps = 1e-5
    bn_scale = gamma / jnp.sqrt(run_var + eps)
    bn_shift = beta - run_mean * bn_scale

    out = gat_layer_forward(h, adj, snorm_n, W, bn_scale, bn_shift, residual)
    out = jax.block_until_ready(out)

    ref = gat_layer_ref(h, adj, snorm_n, W, bn_scale, bn_shift, residual)
    np.testing.assert_allclose(np.asarray(out), np.asarray(ref),
                               rtol=1e-4, atol=1e-4)
    print("KERNEL_OK")
</pallas_src>

<mosaic_0001>
module attributes {stable_mosaic.version = 11 : i64} {
  func.func @_project_kernel(%arg0: i32, %arg1: memref<256x256xf32, #tpu.memory_space<vmem>>, %arg2: memref<256x256xf32, #tpu.memory_space<vmem>>, %arg3: memref<256x256xf32, #tpu.memory_space<vmem>>) attributes {dimension_semantics = [#tpu.dimension_semantics<parallel>], iteration_bounds = array<i64: 1>, scalar_prefetch = 0 : i64, scratch_operands = 0 : i64, tpu.core_type = #tpu.core_type<tc>, window_params = [{transform_indices = @transform_0, window_bounds = array<i64: 256, 256>}, {pipeline_mode = #tpu.pipeline_mode<synchronous>, transform_indices = @transform_1, window_bounds = array<i64: 256, 256>}, {transform_indices = @transform_2, window_bounds = array<i64: 256, 256>}]} {
    %c0 = arith.constant 0 : index
    %c0_0 = arith.constant 0 : index
    %0 = vector.load %arg1[%c0, %c0_0] : memref<256x256xf32, #tpu.memory_space<vmem>>, vector<256x256xf32>
    %c0_1 = arith.constant 0 : index
    %c0_2 = arith.constant 0 : index
    %1 = vector.load %arg2[%c0_1, %c0_2] : memref<256x256xf32, #tpu.memory_space<vmem>>, vector<256x256xf32>
    %cst = arith.constant dense<0.000000e+00> : vector<256x256xf32>
    %2 = tpu.matmul %0, %1, %cst {dimension_numbers = #tpu.dot_dimension_numbers<[1], [0], [0], [1], [0, 0, 1, 1], [], []>} : vector<256x256xf32>, vector<256x256xf32>, vector<256x256xf32> -> vector<256x256xf32>
    %c0_3 = arith.constant 0 : index
    %c0_4 = arith.constant 0 : index
    %3 = vector.load %arg3[%c0_3, %c0_4] : memref<256x256xf32, #tpu.memory_space<vmem>>, vector<256x256xf32>
    tpu.vector_store %arg3[%c0_3, %c0_4], %2 {strides = array<i32>} : memref<256x256xf32, #tpu.memory_space<vmem>>, vector<256x256xf32>,
    return
  }
  func.func @transform_0(%arg0: i32) -> (i32, i32) {
    %c0_i32 = arith.constant 0 : i32
    %c0_i32_0 = arith.constant 0 : i32
    return %arg0, %c0_i32 : i32, i32
  }
  func.func @transform_1(%arg0: i32) -> (i32, i32) {
    %c0_i32 = arith.constant 0 : i32
    %c0_i32_0 = arith.constant 0 : i32
    %c0_i32_1 = arith.constant 0 : i32
    return %c0_i32, %c0_i32_0 : i32, i32
  }
  func.func @transform_2(%arg0: i32) -> (i32, i32) {
    %c0_i32 = arith.constant 0 : i32
    %c0_i32_0 = arith.constant 0 : i32
    return %arg0, %c0_i32 : i32, i32
  }
}

</mosaic_0001>

<llo_original>
// kernel: tpu_custom_call.1
$region0: #{tpu_custom_call.1}
  #allocation0 [shape = 'u32[]', space=smem, size = 0x4, offset = 0x4, fixed_abs, tag = 'smem constant byte address 0x4 - core index']
  #allocation1 [shape = 'u32[144,128]{1,0:T(1,128)}', space=vmem, size = 0x12000, scoped, tag = 'internal scratch']
  %s0 = inlined_call_operand.hbm [shape: f32[256,256], index: 0, kind: input, shape index: {}]
  %s1 = inlined_call_operand.hbm [shape: f32[256,256], index: 1, kind: input, shape index: {}]
  %s2 = inlined_call_operand.hbm [shape: f32[256,256], index: 2, kind: output, shape index: {}]
  %s3 = sld [smem:[#allocation0]]
  $region26: #{tpu_custom_call.1} parent=0
    _
  %s5 = ssub.s32 1, %s3
  %s6 = scalar_select 0, %s5, %s3
  $region1: #{tpu_custom_call.1} parent=0
    #allocation2 [shape = 'u8[262144]{0}', space=vmem, size = 0x40000, scoped, tag = 'input window, operand 0, single buffered']
    #allocation3 [shape = 's32[1]{0}', space=sflag, size = 0x4, scoped, tag = 'scoped memory for tpu_custom_call.1']
    #allocation4 [shape = 's32[1]{0}', space=sflag, size = 0x4, scoped, tag = 'scoped memory for tpu_custom_call.1']
    #allocation5 [shape = 'u8[262144]{0}', space=vmem, size = 0x40000, scoped, tag = 'input window, operand 1, single buffered']
    #allocation6 [shape = 's32[1]{0}', space=sflag, size = 0x4, scoped, tag = 'scoped memory for tpu_custom_call.1']
    #allocation7 [shape = 'u8[262144]{0}', space=vmem, size = 0x40000, scoped, tag = 'output window, operand 0, single buffered']
    %7 = vsyncpa [#allocation3], 0
    %8 = vsyncpa [#allocation6], 0
    %9 = vsyncpa [#allocation4], 0
    // Predicated region
    $region2: #{tpu_custom_call.1} parent=1 // pred_check
      _
    $region3: #{tpu_custom_call.1} parent=1 // pred_check_branch
      %11 = sbr.rel (0) target = $region5
    $region4: #{tpu_custom_call.1} parent=1 // pred_region
      %s13 = ssub.s32 8192, 8192
      %14 = vsyncadd [#allocation3], %s13
      %s15 = sshll.u32 [#allocation2], 4
      %s16 = int_to_ptr.vmem [resolvable:$true] %s15
      %21 = dma.hbm_to_vmem [thread:$0]  %s0, 8192, %s16, [#allocation3], 256, 256, 16
    $region5: #{tpu_custom_call.1} parent=1 // pred_fallthru
      _
    // Predicated region
    $region6: #{tpu_custom_call.1} parent=1 // pred_check
      _
    $region7: #{tpu_custom_call.1} parent=1 // pred_check_branch
      %23 = sbr.rel (0) target = $region9
    $region8: #{tpu_custom_call.1} parent=1 // pred_region
      %s25 = ssub.s32 8192, 8192
      %26 = vsyncadd [#allocation6], %s25
      %s27 = sshll.u32 [#allocation5], 4
      %s28 = int_to_ptr.vmem [resolvable:$true] %s27
      %33 = dma.hbm_to_vmem [thread:$0]  %s1, 8192, %s28, [#allocation6], 256, 256, 16
    $region9: #{tpu_custom_call.1} parent=1 // pred_fallthru
      _
    // Predicated region
    $region10: #{tpu_custom_call.1} parent=1 // pred_check
      _
    $region11: #{tpu_custom_call.1} parent=1 // pred_check_branch
      %35 = sbr.rel (0) target = $region13
    $region12: #{tpu_custom_call.1} parent=1 // pred_region
      %36 = dma.done [#allocation3], 8192
    $region13: #{tpu_custom_call.1} parent=1 // pred_fallthru
      _
    // Predicated region
    $region14: #{tpu_custom_call.1} parent=1 // pred_check
      _
    $region15: #{tpu_custom_call.1} parent=1 // pred_check_branch
      %38 = sbr.rel (0) target = $region17
    $region16: #{tpu_custom_call.1} parent=1 // pred_region
      %39 = dma.done [#allocation6], 8192
    $region17: #{tpu_custom_call.1} parent=1 // pred_fallthru
      _
    %v40 = vld [vmem:[#allocation2] sm:$0xff]
    %v41 = vld [vmem:[#allocation2 + $0x8] sm:$0xff]
    %v42 = vld [vmem:[#allocation2 + $0x10] sm:$0xff]
    %v43 = vld [vmem:[#allocation2 + $0x18] sm:$0xff]
    %v44 = vld [vmem:[#allocation2 + $0x20] sm:$0xff]
    %v45 = vld [vmem:[#allocation2 + $0x28] sm:$0xff]
    %v46 = vld [vmem:[#allocation2 + $0x30] sm:$0xff]
    %v47 = vld [vmem:[#allocation2 + $0x38] sm:$0xff]
    %v48 = vld [vmem:[#allocation2 + $0x40] sm:$0xff]
    %v49 = vld [vmem:[#allocation2 + $0x48] sm:$0xff]
    %v50 = vld [vmem:[#allocation2 + $0x50] sm:$0xff]
    %v51 = vld [vmem:[#allocation2 + $0x58] sm:$0xff]
    %v52 = vld [vmem:[#allocation2 + $0x60] sm:$0xff]
    %v53 = vld [vmem:[#allocation2 + $0x68] sm:$0xff]
    %v54 = vld [vmem:[#allocation2 + $0x70] sm:$0xff]
    %v55 = vld [vmem:[#allocation2 + $0x78] sm:$0xff]
    %v56 = vld [vmem:[#allocation2 + $0x80] sm:$0xff]
    %v57 = vld [vmem:[#allocation2 + $0x88] sm:$0xff]
    %v58 = vld [vmem:[#allocation2 + $0x90] sm:$0xff]
    %v59 = vld [vmem:[#allocation2 + $0x98] sm:$0xff]
    %v60 = vld [vmem:[#allocation2 + $0xa0] sm:$0xff]
    %v61 = vld [vmem:[#allocation2 + $0xa8] sm:$0xff]
    %v62 = vld [vmem:[#allocation2 + $0xb0] sm:$0xff]
    %v63 = vld [vmem:[#allocation2 + $0xb8] sm:$0xff]
    %v64 = vld [vmem:[#allocation2 + $0xc0] sm:$0xff]
    %v65 = vld [vmem:[#allocation2 + $0xc8] sm:$0xff]
    %v66 = vld [vmem:[#allocation2 + $0xd0] sm:$0xff]
    %v67 = vld [vmem:[#allocation2 + $0xd8] sm:$0xff]
    %v68 = vld [vmem:[#allocation2 + $0xe0] sm:$0xff]
    %v69 = vld [vmem:[#allocation2 + $0xe8] sm:$0xff]
    %v70 = vld [vmem:[#allocation2 + $0xf0] sm:$0xff]
    %v71 = vld [vmem:[#allocation2 + $0xf8] sm:$0xff]
    %v72 = vld [vmem:[#allocation2 + $0x100] sm:$0xff]
    %v73 = vld [vmem:[#allocation2 + $0x108] sm:$0xff]
    %v74 = vld [vmem:[#allocation2 + $0x110] sm:$0xff]
    %v75 = vld [vmem:[#allocation2 + $0x118] sm:$0xff]
    %v76 = vld [vmem:[#allocation2 + $0x120] sm:$0xff]
    %v77 = vld [vmem:[#allocation2 + $0x128] sm:$0xff]
    %v78 = vld [vmem:[#allocation2 + $0x130] sm:$0xff]
    %v79 = vld [vmem:[#allocation2 + $0x138] sm:$0xff]
    %v80 = vld [vmem:[#allocation2 + $0x140] sm:$0xff]
    %v81 = vld [vmem:[#allocation2 + $0x148] sm:$0xff]
    %v82 = vld [vmem:[#allocation2 + $0x150] sm:$0xff]
    %v83 = vld [vmem:[#allocation2 + $0x158] sm:$0xff]
    %v84 = vld [vmem:[#allocation2 + $0x160] sm:$0xff]
    %v85 = vld [vmem:[#allocation2 + $0x168] sm:$0xff]
    %v86 = vld [vmem:[#allocation2 + $0x170] sm:$0xff]
    %v87 = vld [vmem:[#allocation2 + $0x178] sm:$0xff]
    %v88 = vld [vmem:[#allocation2 + $0x180] sm:$0xff]
    %v89 = vld [vmem:[#allocation2 + $0x188] sm:$0xff]
    %v90 = vld [vmem:[#allocation2 + $0x190] sm:$0xff]
    %v91 = vld [vmem:[#allocation2 + $0x198] sm:$0xff]
    %v92 = vld [vmem:[#allocation2 + $0x1a0] sm:$0xff]
    %v93 = vld [vmem:[#allocation2 + $0x1a8] sm:$0xff]
    %v94 = vld [vmem:[#allocation2 + $0x1b0] sm:$0xff]
    %v95 = vld [vmem:[#allocation2 + $0x1b8] sm:$0xff]
    %v96 = vld [vmem:[#allocation2 + $0x1c0] sm:$0xff]
    %v97 = vld [vmem:[#allocation2 + $0x1c8] sm:$0xff]
    %v98 = vld [vmem:[#allocation2 + $0x1d0] sm:$0xff]
    %v99 = vld [vmem:[#allocation2 + $0x1d8] sm:$0xff]
    %v100 = vld [vmem:[#allocation2 + $0x1e0] sm:$0xff]
    %v101 = vld [vmem:[#allocation2 + $0x1e8] sm:$0xff]
    %v102 = vld [vmem:[#allocation2 + $0x1f0] sm:$0xff]
    %v103 = vld [vmem:[#allocation2 + $0x1f8] sm:$0xff]
    %v104 = vld [vmem:[#allocation5] sm:$0xff]
    %v105 = vld [vmem:[#allocation5 + $0x8] sm:$0xff]
    %v106 = vld [vmem:[#allocation5 + $0x10] sm:$0xff]
    %v107 = vld [vmem:[#allocation5 + $0x18] sm:$0xff]
    %v108 = vld [vmem:[#allocation5 + $0x20] sm:$0xff]
    %v109 = vld [vmem:[#allocation5 + $0x28] sm:$0xff]
    %v110 = vld [vmem:[#allocation5 + $0x30] sm:$0xff]
    %v111 = vld [vmem:[#allocation5 + $0x38] sm:$0xff]
    %v112 = vld [vmem:[#allocation5 + $0x40] sm:$0xff]
    %v113 = vld [vmem:[#allocation5 + $0x48] sm:$0xff]
    %v114 = vld [vmem:[#allocation5 + $0x50] sm:$0xff]
    %v115 = vld [vmem:[#allocation5 + $0x58] sm:$0xff]
    %v116 = vld [vmem:[#allocation5 + $0x60] sm:$0xff]
    %v117 = vld [vmem:[#allocation5 + $0x68] sm:$0xff]
    %v118 = vld [vmem:[#allocation5 + $0x70] sm:$0xff]
    %v119 = vld [vmem:[#allocation5 + $0x78] sm:$0xff]
    %v120 = vld [vmem:[#allocation5 + $0x80] sm:$0xff]
    %v121 = vld [vmem:[#allocation5 + $0x88] sm:$0xff]
    %v122 = vld [vmem:[#allocation5 + $0x90] sm:$0xff]
    %v123 = vld [vmem:[#allocation5 + $0x98] sm:$0xff]
    %v124 = vld [vmem:[#allocation5 + $0xa0] sm:$0xff]
    %v125 = vld [vmem:[#allocation5 + $0xa8] sm:$0xff]
    %v126 = vld [vmem:[#allocation5 + $0xb0] sm:$0xff]
    %v127 = vld [vmem:[#allocation5 + $0xb8] sm:$0xff]
    %v128 = vld [vmem:[#allocation5 + $0xc0] sm:$0xff]
    %v129 = vld [vmem:[#allocation5 + $0xc8] sm:$0xff]
    %v130 = vld [vmem:[#allocation5 + $0xd0] sm:$0xff]
    %v131 = vld [vmem:[#allocation5 + $0xd8] sm:$0xff]
    %v132 = vld [vmem:[#allocation5 + $0xe0] sm:$0xff]
    %v133 = vld [vmem:[#allocation5 + $0xe8] sm:$0xff]
    %v134 = vld [vmem:[#allocation5 + $0xf0] sm:$0xff]
    %v135 = vld [vmem:[#allocation5 + $0xf8] sm:$0xff]
    %v136 = vld [vmem:[#allocation5 + $0x100] sm:$0xff]
    %v137 = vld [vmem:[#allocation5 + $0x108] sm:$0xff]
    %v138 = vld [vmem:[#allocation5 + $0x110] sm:$0xff]
    %v139 = vld [vmem:[#allocation5 + $0x118] sm:$0xff]
    %v140 = vld [vmem:[#allocation5 + $0x120] sm:$0xff]
    %v141 = vld [vmem:[#allocation5 + $0x128] sm:$0xff]
    %v142 = vld [vmem:[#allocation5 + $0x130] sm:$0xff]
    %v143 = vld [vmem:[#allocation5 + $0x138] sm:$0xff]
    %v144 = vld [vmem:[#allocation5 + $0x140] sm:$0xff]
    %v145 = vld [vmem:[#allocation5 + $0x148] sm:$0xff]
    %v146 = vld [vmem:[#allocation5 + $0x150] sm:$0xff]
    %v147 = vld [vmem:[#allocation5 + $0x158] sm:$0xff]
    %v148 = vld [vmem:[#allocation5 + $0x160] sm:$0xff]
    %v149 = vld [vmem:[#allocation5 + $0x168] sm:$0xff]
    %v150 = vld [vmem:[#allocation5 + $0x170] sm:$0xff]
    %v151 = vld [vmem:[#allocation5 + $0x178] sm:$0xff]
    %v152 = vld [vmem:[#allocation5 + $0x180] sm:$0xff]
    %v153 = vld [vmem:[#allocation5 + $0x188] sm:$0xff]
    %v154 = vld [vmem:[#allocation5 + $0x190] sm:$0xff]
    %v155 = vld [vmem:[#allocation5 + $0x198] sm:$0xff]
    %v156 = vld [vmem:[#allocation5 + $0x1a0] sm:$0xff]
    %v157 = vld [vmem:[#allocation5 + $0x1a8] sm:$0xff]
    %v158 = vld [vmem:[#allocation5 + $0x1b0] sm:$0xff]
    %v159 = vld [vmem:[#allocation5 + $0x1b8] sm:$0xff]
    %v160 = vld [vmem:[#allocation5 + $0x1c0] sm:$0xff]
    %v161 = vld [vmem:[#allocation5 + $0x1c8] sm:$0xff]
    %v162 = vld [vmem:[#allocation5 + $0x1d0] sm:$0xff]
    %v163 = vld [vmem:[#allocation5 + $0x1d8] sm:$0xff]
    %v164 = vld [vmem:[#allocation5 + $0x1e0] sm:$0xff]
    %v165 = vld [vmem:[#allocation5 + $0x1e8] sm:$0xff]
    %v166 = vld [vmem:[#allocation5 + $0x1f0] sm:$0xff]
    %v167 = vld [vmem:[#allocation5 + $0x1f8] sm:$0xff]
    %168 = vmatprep.subr.mxu0 %v105
    %169 = vmatpush1.msra.mxu0 %v104
    %170 = vmatprep.subr.mxu0 %v107
    %171 = vmatpush1.msra.mxu0 %v106
    %172 = vmatprep.subr.mxu0 %v109
    %173 = vmatpush1.msra.mxu0 %v108
    %174 = vmatprep.subr.mxu0 %v111
    %175 = vmatpush1.msra.mxu0 %v110
    %176 = vmatprep.subr.mxu0 %v113
    %177 = vmatpush1.msra.mxu0 %v112
    %178 = vmatprep.subr.mxu0 %v115
    %179 = vmatpush1.msra.mxu0 %v114
    %180 = vmatprep.subr.mxu0 %v117
    %181 = vmatpush1.msra.mxu0 %v116
    %182 = vmatprep.subr.mxu0 %v119
    %183 = vmatpush1.msra.mxu0 %v118
    %184 = vmatprep.subr.mxu0 %v121
    %185 = vmatpush1.msra.mxu0 %v120
    %186 = vmatprep.subr.mxu0 %v123
    %187 = vmatpush1.msra.mxu0 %v122
    %188 = vmatprep.subr.mxu0 %v125
    %189 = vmatpush1.msra.mxu0 %v124
    %190 = vmatprep.subr.mxu0 %v127
    %191 = vmatpush1.msra.mxu0 %v126
    %192 = vmatprep.subr.mxu0 %v129
    %193 = vmatpush1.msra.mxu0 %v128
    %194 = vmatprep.subr.mxu0 %v131
    %195 = vmatpush1.msra.mxu0 %v130
    %196 = vmatprep.subr.mxu0 %v133
    %197 = vmatpush1.msra.mxu0 %v132
    %198 = vmatprep.subr.mxu0 %v135
    %199 = vmatpush1.msra.mxu0 %v134
    %200 = vmatprep.subr.mxu0 %v137
    %201 = vmatpush1.msra.mxu0 %v136
    %202 = vmatprep.subr.mxu0 %v139
    %203 = vmatpush1.msra.mxu0 %v138
    %204 = vmatprep.subr.mxu0 %v141
    %205 = vmatpush1.msra.mxu0 %v140
    %206 = vmatprep.subr.mxu0 %v143
    %207 = vmatpush1.msra.mxu0 %v142
    %208 = vmatprep.subr.mxu0 %v145
    %209 = vmatpush1.msra.mxu0 %v144
    %210 = vmatprep.subr.mxu0 %v147
    %211 = vmatpush1.msra.mxu0 %v146
    %212 = vmatprep.subr.mxu0 %v149
    %213 = vmatpush1.msra.mxu0 %v148
    %214 = vmatprep.subr.mxu0 %v151
    %215 = vmatpush1.msra.mxu0 %v150
    %216 = vmatprep.subr.mxu0 %v153
    %217 = vmatpush1.msra.mxu0 %v152
    %218 = vmatprep.subr.mxu0 %v155
    %219 = vmatpush1.msra.mxu0 %v154
    %220 = vmatprep.subr.mxu0 %v157
    %221 = vmatpush1.msra.mxu0 %v156
    %222 = vmatprep.subr.mxu0 %v159
    %223 = vmatpush1.msra.mxu0 %v158
    %224 = vmatprep.subr.mxu0 %v161
    %225 = vmatpush1.msra.mxu0 %v160
    %226 = vmatprep.subr.mxu0 %v163
    %227 = vmatpush1.msra.mxu0 %v162
    %228 = vmatprep.subr.mxu0 %v165
    %229 = vmatpush1.msra.mxu0 %v164
    %230 = vmatprep.subr.mxu0 %v167
    %231 = vmatpush1.msra.mxu0 %v166
    %232 = vmatprep.mubr.f32.mxu0 %v41
    %233 = vmatmul.mubr.f32.gmra.mrb[0].mxu0 %v40
    %v234 = vpop.f32.mrb[0].mxu0
    %v235 = vadd.f32 0.0, %v234
    %v236 = vpop.f32.mrb[0].mxu0
    %v237 = vadd.f32 0.0, %v236
    %238 = vmatprep.mubr.f32.mxu0 %v43
    %239 = vmatmul.mubr.f32.gmra.mrb[0].mxu0 %v42
    %v240 = vpop.f32.mrb[0].mxu0
    %v241 = vadd.f32 0.0, %v240
    %v242 = vpop.f32.mrb[0].mxu0
    %v243 = vadd.f32 0.0, %v242
    %244 = vmatprep.mubr.f32.mxu0 %v45
    %245 = vmatmul.mubr.f32.gmra.mrb[0].mxu0 %v44
    %v246 = vpop.f32.mrb[0].mxu0
    %v247 = vadd.f32 0.0, %v246
    %v248 = vpop.f32.mrb[0].mxu0
    %v249 = vadd.f32 0.0, %v248
    %250 = vmatprep.mubr.f32.mxu0 %v47
    %251 = vmatmul.mubr.f32.gmra.mrb[0].mxu0 %v46
    %v252 = vpop.f32.mrb[0].mxu0
    %v253 = vadd.f32 0.0, %v252
    %v254 = vpop.f32.mrb[0].mxu0
    %v255 = vadd.f32 0.0, %v254
    %256 = vmatprep.mubr.f32.mxu0 %v49
    %257 = vmatmul.mubr.f32.gmra.mrb[0].mxu0 %v48
    %v258 = vpop.f32.mrb[0].mxu0
    %v259 = vadd.f32 0.0, %v258
    %v260 = vpop.f32.mrb[0].mxu0
    %v261 = vadd.f32 0.0, %v260
    %262 = vmatprep.mubr.f32.mxu0 %v51
    %263 = vmatmul.mubr.f32.gmra.mrb[0].mxu0 %v50
    %v264 = vpop.f32.mrb[0].mxu0
    %v265 = vadd.f32 0.0, %v264
    %v266 = vpop.f32.mrb[0].mxu0
    %v267 = vadd.f32 0.0, %v266
    %268 = vmatprep.mubr.f32.mxu0 %v53
    %269 = vmatmul.mubr.f32.gmra.mrb[0].mxu0 %v52
    %v270 = vpop.f32.mrb[0].mxu0
    %v271 = vadd.f32 0.0, %v270
    %v272 = vpop.f32.mrb[0].mxu0
    %v273 = vadd.f32 0.0, %v272
    %274 = vmatprep.mubr.f32.mxu0 %v55
    %275 = vmatmul.mubr.f32.gmra.mrb[0].mxu0 %v54
    %v276 = vpop.f32.mrb[0].mxu0
    %v277 = vadd.f32 0.0, %v276
    %v278 = vpop.f32.mrb[0].mxu0
    %v279 = vadd.f32 0.0, %v278
    %280 = vmatprep.mubr.f32.mxu0 %v57
    %281 = vmatmul.mubr.f32.gmra.mrb[0].mxu0 %v56
    %v282 = vpop.f32.mrb[0].mxu0
    %v283 = vadd.f32 0.0, %v282
    %v284 = vpop.f32.mrb[0].mxu0
    %v285 = vadd.f32 0.0, %v284
    %286 = vmatprep.mubr.f32.mxu0 %v59
    %287 = vmatmul.mubr.f32.gmra.mrb[0].mxu0 %v58
    %v288 = vpop.f32.mrb[0].mxu0
    %v289 = vadd.f32 0.0, %v288
    %v290 = vpop.f32.mrb[0].mxu0
    %v291 = vadd.f32 0.0, %v290
    %292 = vmatprep.mubr.f32.mxu0 %v61
    %293 = vmatmul.mubr.f32.gmra.mrb[0].mxu0 %v60
    %v294 = vpop.f32.mrb[0].mxu0
    %v295 = vadd.f32 0.0, %v294
    %v296 = vpop.f32.mrb[0].mxu0
    %v297 = vadd.f32 0.0, %v296
    %298 = vmatprep.mubr.f32.mxu0 %v63
    %299 = vmatmul.mubr.f32.gmra.mrb[0].mxu0 %v62
    %v300 = vpop.f32.mrb[0].mxu0
    %v301 = vadd.f32 0.0, %v300
    %v302 = vpop.f32.mrb[0].mxu0
    %v303 = vadd.f32 0.0, %v302
    %304 = vmatprep.mubr.f32.mxu0 %v65
    %305 = vmatmul.mubr.f32.gmra.mrb[0].mxu0 %v64
    %v306 = vpop.f32.mrb[0].mxu0
    %v307 = vadd.f32 0.0, %v306
    %v308 = vpop.f32.mrb[0].mxu0
    %v309 = vadd.f32 0.0, %v308
    %310 = vmatprep.mubr.f32.mxu0 %v67
    %311 = vmatmul.mubr.f32.gmra.mrb[0].mxu0 %v66
    %v312 = vpop.f32.mrb[0].mxu0
    %v313 = vadd.f32 0.0, %v312
    %v314 = vpop.f32.mrb[0].mxu0
    %v315 = vadd.f32 0.0, %v314
    %316 = vmatprep.mubr.f32.mxu0 %v69
    %317 = vmatmul.mubr.f32.gmra.mrb[0].mxu0 %v68
    %v318 = vpop.f32.mrb[0].mxu0
    %v319 = vadd.f32 0.0, %v318
    %v320 = vpop.f32.mrb[0].mxu0
    %v321 = vadd.f32 0.0, %v320
    %322 = vmatprep.mubr.f32.mxu0 %v71
    %323 = vmatmul.mubr.f32.gmra.mrb[0].mxu0 %v70
    %v324 = vpop.f32.mrb[0].mxu0
    %v325 = vadd.f32 0.0, %v324
    %v326 = vpop.f32.mrb[0].mxu0
    %v327 = vadd.f32 0.0, %v326
    %328 = vmatprep.mubr.f32.mxu0 %v73
    %329 = vmatmul.mubr.f32.gmra.mrb[0].mxu0 %v72
    %v330 = vpop.f32.mrb[0].mxu0
    %v331 = vadd.f32 0.0, %v330
    %v332 = vpop.f32.mrb[0].mxu0
    %v333 = vadd.f32 0.0, %v332
    %334 = vmatprep.mubr.f32.mxu0 %v75
    %335 = vmatmul.mubr.f32.gmra.mrb[0].mxu0 %v74
    %v336 = vpop.f32.mrb[0].mxu0
    %v337 = vadd.f32 0.0, %v336
    %v338 = vpop.f32.mrb[0].mxu0
    %v339 = vadd.f32 0.0, %v338
    %340 = vmatprep.mubr.f32.mxu0 %v77
    %341 = vmatmul.mubr.f32.gmra.mrb[0].mxu0 %v76
    %v342 = vpop.f32.mrb[0].mxu0
    %v343 = vadd.f32 0.0, %v342
    %v344 = vpop.f32.mrb[0].mxu0
    %v345 = vadd.f32 0.0, %v344
    %346 = vmatprep.mubr.f32.mxu0 %v79
    %347 = vmatmul.mubr.f32.gmra.mrb[0].mxu0 %v78
    %v348 = vpop.f32.mrb[0].mxu0
    %v349 = vadd.f32 0.0, %v348
    %v350 = vpop.f32.mrb[0].mxu0
    %v351 = vadd.f32 0.0, %v350
    %352 = vmatprep.mubr.f32.mxu0 %v81
    %353 = vmatmul.mubr.f32.gmra.mrb[0].mxu0 %v80
    %v354 = vpop.f32.mrb[0].mxu0
    %v355 = vadd.f32 0.0, %v354
    %v356 = vpop.f32.mrb[0].mxu0
    %v357 = vadd.f32 0.0, %v356
    %358 = vmatprep.mubr.f32.mxu0 %v83
    %359 = vmatmul.mubr.f32.gmra.mrb[0].mxu0 %v82
    %v360 = vpop.f32.mrb[0].mxu0
    %v361 = vadd.f32 0.0, %v360
    %v362 = vpop.f32.mrb[0].mxu0
    %v363 = vadd.f32 0.0, %v362
    %364 = vmatprep.mubr.f32.mxu0 %v85
    %365 = vmatmul.mubr.f32.gmra.mrb[0].mxu0 %v84
    %v366 = vpop.f32.mrb[0].mxu0
    %v367 = vadd.f32 0.0, %v366
    %v368 = vpop.f32.mrb[0].mxu0
    %v369 = vadd.f32 0.0, %v368
    %370 = vmatprep.mubr.f32.mxu0 %v87
    %371 = vmatmul.mubr.f32.gmra.mrb[0].mxu0 %v86
    %v372 = vpop.f32.mrb[0].mxu0
    %v373 = vadd.f32 0.0, %v372
    %v374 = vpop.f32.mrb[0].mxu0
    %v375 = vadd.f32 0.0, %v374
    %376 = vmatprep.mubr.f32.mxu0 %v89
    %377 = vmatmul.mubr.f32.gmra.mrb[0].mxu0 %v88
    %v378 = vpop.f32.mrb[0].mxu0
    %v379 = vadd.f32 0.0, %v378
    %v380 = vpop.f32.mrb[0].mxu0
    %v381 = vadd.f32 0.0, %v380
    %382 = vmatprep.mubr.f32.mxu0 %v91
    %383 = vmatmul.mubr.f32.gmra.mrb[0].mxu0 %v90
    %v384 = vpop.f32.mrb[0].mxu0
    %v385 = vadd.f32 0.0, %v384
    %v386 = vpop.f32.mrb[0].mxu0
    %v387 = vadd.f32 0.0, %v386
    %388 = vmatprep.mubr.f32.mxu0 %v93
    %389 = vmatmul.mubr.f32.gmra.mrb[0].mxu0 %v92
    %v390 = vpop.f32.mrb[0].mxu0
    %v391 = vadd.f32 0.0, %v390
    %v392 = vpop.f32.mrb[0].mxu0
    %v393 = vadd.f32 0.0, %v392
    %394 = vmatprep.mubr.f32.mxu0 %v95
    %395 = vmatmul.mubr.f32.gmra.mrb[0].mxu0 %v94
    %v396 = vpop.f32.mrb[0].mxu0
    %v397 = vadd.f32 0.0, %v396
    %v398 = vpop.f32.mrb[0].mxu0
    %v399 = vadd.f32 0.0, %v398
    %400 = vmatprep.mubr.f32.mxu0 %v97
    %401 = vmatmul.mubr.f32.gmra.mrb[0].mxu0 %v96
    %v402 = vpop.f32.mrb[0].mxu0
    %v403 = vadd.f32 0.0, %v402
    %v404 = vpop.f32.mrb[0].mxu0
    %v405 = vadd.f32 0.0, %v404
    %406 = vmatprep.mubr.f32.mxu0 %v99
    %407 = vmatmul.mubr.f32.gmra.mrb[0].mxu0 %v98
    %v408 = vpop.f32.mrb[0].mxu0
    %v409 = vadd.f32 0.0, %v408
    %v410 = vpop.f32.mrb[0].mxu0
    %v411 = vadd.f32 0.0, %v410
    %412 = vmatprep.mubr.f32.mxu0 %v101
    %413 = vmatmul.mubr.f32.gmra.mrb[0].mxu0 %v100
    %v414 = vpop.f32.mrb[0].mxu0
    %v415 = vadd.f32 0.0, %v414
    %v416 = vpop.f32.mrb[0].mxu0
    %v417 = vadd.f32 0.0, %v416
    %418 = vmatprep.mubr.f32.mxu0 %v103
    %419 = vmatmul.mubr.f32.gmra.mrb[0].mxu0 %v102
    %v420 = vpop.f32.mrb[0].mxu0
    %v421 = vadd.f32 0.0, %v420
    %v422 = vpop.f32.mrb[0].mxu0
    %v423 = vadd.f32 0.0, %v422
    %424 = vdwg.mxu0
    %425 = vst [vmem:[#allocation7] sm:$0xff] %v235
    %426 = vst [vmem:[#allocation7 + $0x8] sm:$0xff] %v237
    %427 = vst [vmem:[#allocation7 + $0x10] sm:$0xff] %v241
    %428 = vst [vmem:[#allocation7 + $0x18] sm:$0xff] %v243
    %429 = vst [vmem:[#allocation7 + $0x20] sm:$0xff] %v247
    %430 = vst [vmem:[#allocation7 + $0x28] sm:$0xff] %v249
    %431 = vst [vmem:[#allocation7 + $0x30] sm:$0xff] %v253
    %432 = vst [vmem:[#allocation7 + $0x38] sm:$0xff] %v255
    %433 = vst [vmem:[#allocation7 + $0x40] sm:$0xff] %v259
    %434 = vst [vmem:[#allocation7 + $0x48] sm:$0xff] %v261
    %435 = vst [vmem:[#allocation7 + $0x50] sm:$0xff] %v265
    %436 = vst [vmem:[#allocation7 + $0x58] sm:$0xff] %v267
    %437 = vst [vmem:[#allocation7 + $0x60] sm:$0xff] %v271
    %438 = vst [vmem:[#allocation7 + $0x68] sm:$0xff] %v273
    %439 = vst [vmem:[#allocation7 + $0x70] sm:$0xff] %v277
    %440 = vst [vmem:[#allocation7 + $0x78] sm:$0xff] %v279
    %441 = vst [vmem:[#allocation7 + $0x80] sm:$0xff] %v283
    %442 = vst [vmem:[#allocation7 + $0x88] sm:$0xff] %v285
    %443 = vst [vmem:[#allocation7 + $0x90] sm:$0xff] %v289
    %444 = vst [vmem:[#allocation7 + $0x98] sm:$0xff] %v291
    %445 = vst [vmem:[#allocation7 + $0xa0] sm:$0xff] %v295
    %446 = vst [vmem:[#allocation7 + $0xa8] sm:$0xff] %v297
    %447 = vst [vmem:[#allocation7 + $0xb0] sm:$0xff] %v301
    %448 = vst [vmem:[#allocation7 + $0xb8] sm:$0xff] %v303
    %449 = vst [vmem:[#allocation7 + $0xc0] sm:$0xff] %v307
    %450 = vst [vmem:[#allocation7 + $0xc8] sm:$0xff] %v309
    %451 = vst [vmem:[#allocation7 + $0xd0] sm:$0xff] %v313
    %452 = vst [vmem:[#allocation7 + $0xd8] sm:$0xff] %v315
    %453 = vst [vmem:[#allocation7 + $0xe0] sm:$0xff] %v319
    %454 = vst [vmem:[#allocation7 + $0xe8] sm:$0xff] %v321
    %455 = vst [vmem:[#allocation7 + $0xf0] sm:$0xff] %v325
    %456 = vst [vmem:[#allocation7 + $0xf8] sm:$0xff] %v327
    %457 = vst [vmem:[#allocation7 + $0x100] sm:$0xff] %v331
    %458 = vst [vmem:[#allocation7 + $0x108] sm:$0xff] %v333
    %459 = vst [vmem:[#allocation7 + $0x110] sm:$0xff] %v337
    %460 = vst [vmem:[#allocation7 + $0x118] sm:$0xff] %v339
    %461 = vst [vmem:[#allocation7 + $0x120] sm:$0xff] %v343
    %462 = vst [vmem:[#allocation7 + $0x128] sm:$0xff] %v345
    %463 = vst [vmem:[#allocation7 + $0x130] sm:$0xff] %v349
    %464 = vst [vmem:[#allocation7 + $0x138] sm:$0xff] %v351
    %465 = vst [vmem:[#allocation7 + $0x140] sm:$0xff] %v355
    %466 = vst [vmem:[#allocation7 + $0x148] sm:$0xff] %v357
    %467 = vst [vmem:[#allocation7 + $0x150] sm:$0xff] %v361
    %468 = vst [vmem:[#allocation7 + $0x158] sm:$0xff] %v363
    %469 = vst [vmem:[#allocation7 + $0x160] sm:$0xff] %v367
    %470 = vst [vmem:[#allocation7 + $0x168] sm:$0xff] %v369
    %471 = vst [vmem:[#allocation7 + $0x170] sm:$0xff] %v373
    %472 = vst [vmem:[#allocation7 + $0x178] sm:$0xff] %v375
    %473 = vst [vmem:[#allocation7 + $0x180] sm:$0xff] %v379
    %474 = vst [vmem:[#allocation7 + $0x188] sm:$0xff] %v381
    %475 = vst [vmem:[#allocation7 + $0x190] sm:$0xff] %v385
    %476 = vst [vmem:[#allocation7 + $0x198] sm:$0xff] %v387
    %477 = vst [vmem:[#allocation7 + $0x1a0] sm:$0xff] %v391
    %478 = vst [vmem:[#allocation7 + $0x1a8] sm:$0xff] %v393
    %479 = vst [vmem:[#allocation7 + $0x1b0] sm:$0xff] %v397
    %480 = vst [vmem:[#allocation7 + $0x1b8] sm:$0xff] %v399
    %481 = vst [vmem:[#allocation7 + $0x1c0] sm:$0xff] %v403
    %482 = vst [vmem:[#allocation7 + $0x1c8] sm:$0xff] %v405
    %483 = vst [vmem:[#allocation7 + $0x1d0] sm:$0xff] %v409
    %484 = vst [vmem:[#allocation7 + $0x1d8] sm:$0xff] %v411
    %485 = vst [vmem:[#allocation7 + $0x1e0] sm:$0xff] %v415
    %486 = vst [vmem:[#allocation7 + $0x1e8] sm:$0xff] %v417
    %487 = vst [vmem:[#allocation7 + $0x1f0] sm:$0xff] %v421
    %488 = vst [vmem:[#allocation7 + $0x1f8] sm:$0xff] %v423
    // Predicated region
    $region18: #{tpu_custom_call.1} parent=1 // pred_check
      _
    $region19: #{tpu_custom_call.1} parent=1 // pred_check_branch
      %490 = sbr.rel (0) target = $region21
    $region20: #{tpu_custom_call.1} parent=1 // pred_region
      %s492 = ssub.s32 8192, 8192
      %493 = vsyncadd [#allocation4], %s492
      %s494 = sshll.u32 [#allocation7], 4
      %s495 = int_to_ptr.vmem [resolvable:$true] %s494
      %500 = dma.vmem_to_hbm [thread:$0]  %s495, 8192, %s2, [#allocation4], 256, 256, 16
    $region21: #{tpu_custom_call.1} parent=1 // pred_fallthru
      _
    // Predicated region
    $region22: #{tpu_custom_call.1} parent=1 // pred_check
      _
    $region23: #{tpu_custom_call.1} parent=1 // pred_check_branch
      %502 = sbr.rel (0) target = $region25
    $region24: #{tpu_custom_call.1} parent=1 // pred_region
      %503 = dma.done [#allocation4], 8192
    $region25: #{tpu_custom_call.1} parent=1 // pred_fallthru
      _
    %504 = vsyncpa [#allocation3], 1
    %505 = vsyncpa [#allocation6], 1
    %506 = vsyncpa [#allocation4], 1

</llo_original>
